<compile_context>
chip_gen: v6e
topology: v6e:2x2x1
jax: 0.10.0
libtpu: 0.0.40
codegen_flags: <defaults>
</compile_context>

<pallas_src>
import jax
import jax.numpy as jnp
from jax.experimental import pallas as pl
from jax.experimental.pallas import tpu as pltpu

LANE = 128
BF16_SUBLANE = 16  # bf16 minimum tile is (16, 128)


def _round_up(x, m):
    return (x + m - 1) // m * m


def _vmem_cap_bytes():
    """Physical VMEM minus headroom; used to cap vmem_limit_bytes (v7x: 64 MiB/TC)."""
    try:
        cap = pltpu.get_tpu_info().vmem_capacity_bytes
    except Exception:
        cap = 64 * 1024 * 1024  # conservative fallback (v7x per-TC VMEM)
    return max(cap - 6 * 1024 * 1024, 16 * 1024 * 1024)


def lstm_cell_kernel(xh_ref, c_ref, w_ref, b_ref, h_out_ref, c_out_ref):
    """One batch tile of the LSTM cell.

    xh_ref: (TB, IN_P + HP) bf16   -- pre-packed [x | h]
    c_ref:  (TB, HP) f32
    w_ref:  (IN_P + HP, 4*HP) bf16 -- gates packed (forget, in, cell, out)
    b_ref:  (1, 4*HP) f32
    """
    hp = c_ref.shape[1]

    # Single fused MXU contraction (bf16 operands, f32 accumulation).
    gates = jnp.dot(xh_ref[...], w_ref[...], preferred_element_type=jnp.float32)
    gates = gates + b_ref[...]  # single broadcasted f32 bias add

    def _sigmoid(v):
        # sigmoid(x) == 0.5*tanh(0.5*x) + 0.5 : one EUP push per element
        # instead of exp + divide (EUP is the binding slot for small K).
        return 0.5 * jnp.tanh(0.5 * v) + 0.5

    # Gate slices are HP-wide (multiple of 128) -> lane-aligned, no repacking.
    forget_gate = _sigmoid(gates[:, 0 * hp:1 * hp])
    in_gate     = _sigmoid(gates[:, 1 * hp:2 * hp])
    cell_gate   = jnp.tanh(gates[:, 2 * hp:3 * hp])
    out_gate    = _sigmoid(gates[:, 3 * hp:4 * hp])

    # Element-wise epilogue kept in f32 (v5e has no bf16 VPU/EUP).
    new_cell = forget_gate * c_ref[...] + in_gate * cell_gate
    new_hidden = jnp.tanh(new_cell) * out_gate

    h_out_ref[...] = new_hidden.astype(h_out_ref.dtype)
    c_out_ref[...] = new_cell.astype(c_out_ref.dtype)


def init_params(key, in_features, hidden_features):
    """Deterministic synthetic parameters for the 8 Linear layers, fused into
    Wx: (in, 4H), Wh: (H, 4H), b: (4H,).  Gate order: forget, in, cell, out."""
    ks = jax.random.split(key, 12)
    scale_x = 1.0 / jnp.sqrt(in_features)
    scale_h = 1.0 / jnp.sqrt(hidden_features)
    wx_parts, wh_parts, b_parts = [], [], []
    for g in range(4):
        wx_parts.append(scale_x * jax.random.normal(
            ks[3 * g + 0], (in_features, hidden_features), jnp.float32))
        wh_parts.append(scale_h * jax.random.normal(
            ks[3 * g + 1], (hidden_features, hidden_features), jnp.float32))
        # the two Linear biases of each gate summed into one
        b_parts.append(scale_h * jax.random.normal(
            ks[3 * g + 2], (hidden_features,), jnp.float32))
    wx = jnp.concatenate(wx_parts, axis=1)   # (in, 4H)
    wh = jnp.concatenate(wh_parts, axis=1)   # (H, 4H)
    b = jnp.concatenate(b_parts, axis=0)     # (4H,)
    return wx, wh, b


def pack_params(wx, wh, b):
    """Pad each gate block to lane-dense width and fuse [Wx; Wh] into one
    bf16 slab.  Returns (W (IN_P+HP, 4*HP) bf16, b (1, 4*HP) f32)."""
    in_features, four_h = wx.shape
    hidden = four_h // 4
    in_p = _round_up(in_features, LANE)
    hp = _round_up(hidden, LANE)

    def pad_gate_blocks(w, rows, rows_p):
        w4 = w.reshape(rows, 4, hidden)
        w4 = jnp.pad(w4, ((0, rows_p - rows), (0, 0), (0, hp - hidden)))
        return w4.reshape(rows_p, 4 * hp)

    wx_p = pad_gate_blocks(wx, in_features, in_p)
    wh_p = pad_gate_blocks(wh, hidden, hp)
    w_packed = jnp.concatenate([wx_p, wh_p], axis=0).astype(jnp.bfloat16)
    b_packed = jnp.pad(b.reshape(4, hidden),
                       ((0, 0), (0, hp - hidden))).reshape(1, 4 * hp)
    return w_packed, b_packed.astype(jnp.float32)


def lstm_cell_forward(x, hidden, cell, w_packed, b_packed, *, block_b=256,
                      h_out_dtype=jnp.float32):
    """Runs one LSTMCell step. Returns (hidden, (hidden, cell)) like the torch module."""
    B, in_features = x.shape
    _, H = hidden.shape
    kp, four_hp = w_packed.shape
    hp = four_hp // 4
    in_p = kp - hp

    # bf16 activation tiles -> 16-row sublane granularity; batch padded to a tile multiple.
    tb = _round_up(min(block_b, _round_up(B, BF16_SUBLANE)), BF16_SUBLANE)
    bp = _round_up(B, tb)

    # Pre-pack [x | h] into one lane-dense bf16 slab in the wrapper: no
    # in-kernel concat/cast, halved activation DMA, one fewer input stream.
    x_p = jnp.pad(x.astype(jnp.bfloat16), ((0, bp - B), (0, in_p - in_features)))
    h_p = jnp.pad(hidden.astype(jnp.bfloat16), ((0, bp - B), (0, hp - H)))
    xh_p = jnp.concatenate([x_p, h_p], axis=1)            # (bp, kp) bf16
    c_p = jnp.pad(cell, ((0, bp - B), (0, hp - H)))        # (bp, hp) f32

    grid = (bp // tb,)
    h_itemsize = jnp.dtype(h_out_dtype).itemsize

    # Advisory cost model for the XLA scheduler.
    flops = 2 * bp * kp * four_hp
    transcendentals = 5 * bp * hp
    bytes_accessed = (xh_p.size * 2 + c_p.size * 4
                      + w_packed.size * 2 + b_packed.size * 4
                      + bp * hp * (h_itemsize + 4))

    def _build(single_buffer_weights):
        # Resident weights: Buffered(1) keeps a single copy (constant index_map).
        wbuf = 1 if single_buffer_weights else 2
        w_kwargs = (dict(pipeline_mode=pl.Buffered(1))
                    if single_buffer_weights else {})

        vmem_needed = (
            wbuf * (w_packed.size * 2 + b_packed.size * 4)      # resident W + bias
            + 2 * (tb * kp * 2 + tb * hp * 4)                    # xh (bf16) + c (f32), 2 bufs
            + 2 * tb * hp * (h_itemsize + 4)                     # h/c out tiles, 2 bufs
            + tb * four_hp * 4 + 2 * tb * hp * 4)                # gates + epilogue temps
        compiler_kwargs = dict(dimension_semantics=("parallel",))
        if vmem_needed > 16 * 1024 * 1024:  # v5e scoped default; v6e/v7x default 32 MiB
            compiler_kwargs["vmem_limit_bytes"] = int(
                min(max(2 * vmem_needed, 32 * 1024 * 1024), _vmem_cap_bytes()))

        return pl.pallas_call(
            lstm_cell_kernel,
            out_shape=(
                jax.ShapeDtypeStruct((bp, hp), h_out_dtype),
                jax.ShapeDtypeStruct((bp, hp), jnp.float32),
            ),
            grid=grid,
            in_specs=[
                pl.BlockSpec((tb, kp), lambda i: (i, 0)),                   # xh tile
                pl.BlockSpec((tb, hp), lambda i: (i, 0)),                   # c tile
                pl.BlockSpec((kp, four_hp), lambda i: (0, 0), **w_kwargs),  # W, resident
                pl.BlockSpec((1, four_hp), lambda i: (0, 0), **w_kwargs),   # bias, resident
            ],
            out_specs=(
                pl.BlockSpec((tb, hp), lambda i: (i, 0)),
                pl.BlockSpec((tb, hp), lambda i: (i, 0)),
            ),
            compiler_params=pltpu.CompilerParams(**compiler_kwargs),
            cost_estimate=pl.CostEstimate(
                flops=flops,
                transcendentals=transcendentals,
                bytes_accessed=bytes_accessed),
        )

    try:
        h_new, c_new = _build(True)(xh_p, c_p, w_packed, b_packed)
    except Exception:
        # Fallback if this jax version rejects Buffered(1) single-buffering.
        h_new, c_new = _build(False)(xh_p, c_p, w_packed, b_packed)

    h_out = h_new[:B, :H].astype(jnp.float32)
    c_out = c_new[:B, :H]
    return h_out, (h_out, c_out)


def reference_forward(x, hidden, cell, wx, wh, b):
    """Pure-JAX f32 reference matching the PyTorch module semantics."""
    H = hidden.shape[1]
    gates = x @ wx + hidden @ wh + b[None, :]
    f = jax.nn.sigmoid(gates[:, 0 * H:1 * H])
    i = jax.nn.sigmoid(gates[:, 1 * H:2 * H])
    g = jnp.tanh(gates[:, 2 * H:3 * H])
    o = jax.nn.sigmoid(gates[:, 3 * H:4 * H])
    c = f * cell + i * g
    h = jnp.tanh(c) * o
    return h, (h, c)


if __name__ == "__main__":
    batch = 8
    in_features = 16
    hidden_features = 32

    key = jax.random.PRNGKey(0)
    k_x, k_p = jax.random.split(key)
    x = jax.random.normal(k_x, (batch, in_features), jnp.float32)
    wx, wh, b = init_params(k_p, in_features, hidden_features)
    w_packed, b_packed = pack_params(wx, wh, b)

    # memory=None path of the PyTorch module -> zero-initialized hidden/cell.
    hidden0 = jnp.zeros((batch, hidden_features), jnp.float32)
    cell0 = jnp.zeros((batch, hidden_features), jnp.float32)

    h_out, (h_mem, c_mem) = lstm_cell_forward(x, hidden0, cell0,
                                              w_packed, b_packed)
    jax.block_until_ready((h_out, h_mem, c_mem))

    # Correctness vs. pure-f32 reference; tolerance covers bf16 rounding of the
    # MXU operands (weights + activations stored bf16, f32 acc & epilogue).
    h_ref, (_, c_ref) = reference_forward(x, hidden0, cell0, wx, wh, b)
    assert jnp.allclose(h_out, h_ref, atol=2e-2, rtol=2e-2), \
        float(jnp.max(jnp.abs(h_out - h_ref)))
    assert jnp.allclose(c_mem, c_ref, atol=2e-2, rtol=2e-2), \
        float(jnp.max(jnp.abs(c_mem - c_ref)))

    print("KERNEL_OK")
</pallas_src>

<mosaic_0001>
module attributes {stable_mosaic.version = 11 : i64} {
  func.func @lstm_cell_kernel(%arg0: i32, %arg1: memref<16x256xbf16, #tpu.memory_space<vmem>>, %arg2: memref<16x128xf32, #tpu.memory_space<vmem>>, %arg3: memref<256x512xbf16, #tpu.memory_space<vmem>>, %arg4: memref<1x512xf32, #tpu.memory_space<vmem>>, %arg5: memref<16x128xf32, #tpu.memory_space<vmem>>, %arg6: memref<16x128xf32, #tpu.memory_space<vmem>>) attributes {dimension_semantics = [#tpu.dimension_semantics<parallel>], iteration_bounds = array<i64: 1>, scalar_prefetch = 0 : i64, scratch_operands = 0 : i64, tpu.core_type = #tpu.core_type<tc>, window_params = [{transform_indices = @transform_0, window_bounds = array<i64: 16, 256>}, {transform_indices = @transform_1, window_bounds = array<i64: 16, 128>}, {pipeline_mode = #tpu.pipeline_mode<synchronous>, transform_indices = @transform_2, window_bounds = array<i64: 256, 512>}, {pipeline_mode = #tpu.pipeline_mode<synchronous>, transform_indices = @transform_3, window_bounds = array<i64: 1, 512>}, {transform_indices = @transform_4, window_bounds = array<i64: 16, 128>}, {transform_indices = @transform_5, window_bounds = array<i64: 16, 128>}]} {
    %c0 = arith.constant 0 : index
    %c0_0 = arith.constant 0 : index
    %0 = vector.load %arg1[%c0, %c0_0] : memref<16x256xbf16, #tpu.memory_space<vmem>>, vector<16x256xbf16>
    %c0_1 = arith.constant 0 : index
    %c0_2 = arith.constant 0 : index
    %1 = vector.load %arg3[%c0_1, %c0_2] : memref<256x512xbf16, #tpu.memory_space<vmem>>, vector<256x512xbf16>
    %cst = arith.constant dense<0.000000e+00> : vector<16x512xf32>
    %2 = tpu.matmul %0, %1, %cst {dimension_numbers = #tpu.dot_dimension_numbers<[1], [0], [0], [1], [0, 0, 1, 1], [], []>} : vector<16x256xbf16>, vector<256x512xbf16>, vector<16x512xf32> -> vector<16x512xf32>
    %c0_3 = arith.constant 0 : index
    %c0_4 = arith.constant 0 : index
    %3 = vector.load %arg4[%c0_3, %c0_4] : memref<1x512xf32, #tpu.memory_space<vmem>>, vector<1x512xf32>
    %4 = vector.broadcast %3 : vector<1x512xf32> to vector<16x512xf32>
    %5 = arith.addf %2, %4 : vector<16x512xf32>
    %6 = vector.extract_strided_slice %5 {offsets = [0, 0], sizes = [16, 128], strides = [1, 1]} : vector<16x512xf32> to vector<16x128xf32>
    %cst_5 = arith.constant 5.000000e-01 : f32
    %7 = vector.broadcast %cst_5 : f32 to vector<16x128xf32>
    %8 = arith.mulf %7, %6 : vector<16x128xf32>
    %9 = math.tanh %8 : vector<16x128xf32>
    %cst_6 = arith.constant 5.000000e-01 : f32
    %10 = vector.broadcast %cst_6 : f32 to vector<16x128xf32>
    %11 = arith.mulf %10, %9 : vector<16x128xf32>
    %cst_7 = arith.constant 5.000000e-01 : f32
    %12 = vector.broadcast %cst_7 : f32 to vector<16x128xf32>
    %13 = arith.addf %11, %12 : vector<16x128xf32>
    %14 = vector.extract_strided_slice %5 {offsets = [0, 128], sizes = [16, 128], strides = [1, 1]} : vector<16x512xf32> to vector<16x128xf32>
    %cst_8 = arith.constant 5.000000e-01 : f32
    %15 = vector.broadcast %cst_8 : f32 to vector<16x128xf32>
    %16 = arith.mulf %15, %14 : vector<16x128xf32>
    %17 = math.tanh %16 : vector<16x128xf32>
    %cst_9 = arith.constant 5.000000e-01 : f32
    %18 = vector.broadcast %cst_9 : f32 to vector<16x128xf32>
    %19 = arith.mulf %18, %17 : vector<16x128xf32>
    %cst_10 = arith.constant 5.000000e-01 : f32
    %20 = vector.broadcast %cst_10 : f32 to vector<16x128xf32>
    %21 = arith.addf %19, %20 : vector<16x128xf32>
    %22 = vector.extract_strided_slice %5 {offsets = [0, 256], sizes = [16, 128], strides = [1, 1]} : vector<16x512xf32> to vector<16x128xf32>
    %23 = math.tanh %22 : vector<16x128xf32>
    %24 = vector.extract_strided_slice %5 {offsets = [0, 384], sizes = [16, 128], strides = [1, 1]} : vector<16x512xf32> to vector<16x128xf32>
    %cst_11 = arith.constant 5.000000e-01 : f32
    %25 = vector.broadcast %cst_11 : f32 to vector<16x128xf32>
    %26 = arith.mulf %25, %24 : vector<16x128xf32>
    %27 = math.tanh %26 : vector<16x128xf32>
    %cst_12 = arith.constant 5.000000e-01 : f32
    %28 = vector.broadcast %cst_12 : f32 to vector<16x128xf32>
    %29 = arith.mulf %28, %27 : vector<16x128xf32>
    %cst_13 = arith.constant 5.000000e-01 : f32
    %30 = vector.broadcast %cst_13 : f32 to vector<16x128xf32>
    %31 = arith.addf %29, %30 : vector<16x128xf32>
    %c0_14 = arith.constant 0 : index
    %c0_15 = arith.constant 0 : index
    %32 = vector.load %arg2[%c0_14, %c0_15] : memref<16x128xf32, #tpu.memory_space<vmem>>, vector<16x128xf32>
    %33 = arith.mulf %13, %32 : vector<16x128xf32>
    %34 = arith.mulf %21, %23 : vector<16x128xf32>
    %35 = arith.addf %33, %34 : vector<16x128xf32>
    %36 = math.tanh %35 : vector<16x128xf32>
    %37 = arith.mulf %36, %31 : vector<16x128xf32>
    %c0_16 = arith.constant 0 : index
    %c0_17 = arith.constant 0 : index
    %38 = vector.load %arg5[%c0_16, %c0_17] : memref<16x128xf32, #tpu.memory_space<vmem>>, vector<16x128xf32>
    tpu.vector_store %arg5[%c0_16, %c0_17], %37 {strides = array<i32>} : memref<16x128xf32, #tpu.memory_space<vmem>>, vector<16x128xf32>,
    %c0_18 = arith.constant 0 : index
    %c0_19 = arith.constant 0 : index
    %39 = vector.load %arg6[%c0_18, %c0_19] : memref<16x128xf32, #tpu.memory_space<vmem>>, vector<16x128xf32>
    tpu.vector_store %arg6[%c0_18, %c0_19], %35 {strides = array<i32>} : memref<16x128xf32, #tpu.memory_space<vmem>>, vector<16x128xf32>,
    return
  }
  func.func @transform_0(%arg0: i32) -> (i32, i32) {
    %c0_i32 = arith.constant 0 : i32
    %c0_i32_0 = arith.constant 0 : i32
    return %arg0, %c0_i32 : i32, i32
  }
  func.func @transform_1(%arg0: i32) -> (i32, i32) {
    %c0_i32 = arith.constant 0 : i32
    %c0_i32_0 = arith.constant 0 : i32
    return %arg0, %c0_i32 : i32, i32
  }
  func.func @transform_2(%arg0: i32) -> (i32, i32) {
    %c0_i32 = arith.constant 0 : i32
    %c0_i32_0 = arith.constant 0 : i32
    %c0_i32_1 = arith.constant 0 : i32
    return %c0_i32, %c0_i32_0 : i32, i32
  }
  func.func @transform_3(%arg0: i32) -> (i32, i32) {
    %c0_i32 = arith.constant 0 : i32
    %c0_i32_0 = arith.constant 0 : i32
    %c0_i32_1 = arith.constant 0 : i32
    return %c0_i32, %c0_i32_0 : i32, i32
  }
  func.func @transform_4(%arg0: i32) -> (i32, i32) {
    %c0_i32 = arith.constant 0 : i32
    %c0_i32_0 = arith.constant 0 : i32
    return %arg0, %c0_i32 : i32, i32
  }
  func.func @transform_5(%arg0: i32) -> (i32, i32) {
    %c0_i32 = arith.constant 0 : i32
    %c0_i32_0 = arith.constant 0 : i32
    return %arg0, %c0_i32 : i32, i32
  }
}

module attributes {stable_mosaic.version = 11 : i64} {
  func.func @lstm_cell_kernel(%arg0: i32, %arg1: memref<16x256xbf16, #tpu.memory_space<vmem>>, %arg2: memref<16x128xf32, #tpu.memory_space<vmem>>, %arg3: memref<256x512xbf16, #tpu.memory_space<vmem>>, %arg4: memref<1x512xf32, #tpu.memory_space<vmem>>, %arg5: memref<16x128xf32, #tpu.memory_space<vmem>>, %arg6: memref<16x128xf32, #tpu.memory_space<vmem>>) attributes {dimension_semantics = [#tpu.dimension_semantics<parallel>], iteration_bounds = array<i64: 1>, scalar_prefetch = 0 : i64, scratch_operands = 0 : i64, tpu.core_type = #tpu.core_type<tc>, window_params = [{transform_indices = @transform_0, window_bounds = array<i64: 16, 256>}, {transform_indices = @transform_1, window_bounds = array<i64: 16, 128>}, {pipeline_mode = #tpu.pipeline_mode<synchronous>, transform_indices = @transform_2, window_bounds = array<i64: 256, 512>}, {pipeline_mode = #tpu.pipeline_mode<synchronous>, transform_indices = @transform_3, window_bounds = array<i64: 1, 512>}, {transform_indices = @transform_4, window_bounds = array<i64: 16, 128>}, {transform_indices = @transform_5, window_bounds = array<i64: 16, 128>}]} {
    %c0 = arith.constant 0 : index
    %c0_0 = arith.constant 0 : index
    %0 = vector.load %arg1[%c0, %c0_0] : memref<16x256xbf16, #tpu.memory_space<vmem>>, vector<16x256xbf16>
    %c0_1 = arith.constant 0 : index
    %c0_2 = arith.constant 0 : index
    %1 = vector.load %arg3[%c0_1, %c0_2] : memref<256x512xbf16, #tpu.memory_space<vmem>>, vector<256x512xbf16>
    %cst = arith.constant dense<0.000000e+00> : vector<16x512xf32>
    %2 = tpu.matmul %0, %1, %cst {dimension_numbers = #tpu.dot_dimension_numbers<[1], [0], [0], [1], [0, 0, 1, 1], [], []>} : vector<16x256xbf16>, vector<256x512xbf16>, vector<16x512xf32> -> vector<16x512xf32>
    %c0_3 = arith.constant 0 : index
    %c0_4 = arith.constant 0 : index
    %3 = vector.load %arg4[%c0_3, %c0_4] : memref<1x512xf32, #tpu.memory_space<vmem>>, vector<1x512xf32>
    %4 = vector.broadcast %3 : vector<1x512xf32> to vector<16x512xf32>
    %5 = arith.addf %2, %4 : vector<16x512xf32>
    %6 = vector.extract_strided_slice %5 {offsets = [0, 0], sizes = [16, 128], strides = [1, 1]} : vector<16x512xf32> to vector<16x128xf32>
    %cst_5 = arith.constant 5.000000e-01 : f32
    %7 = vector.broadcast %cst_5 : f32 to vector<16x128xf32>
    %8 = arith.mulf %7, %6 : vector<16x128xf32>
    %9 = math.tanh %8 : vector<16x128xf32>
    %cst_6 = arith.constant 5.000000e-01 : f32
    %10 = vector.broadcast %cst_6 : f32 to vector<16x128xf32>
    %11 = arith.mulf %10, %9 : vector<16x128xf32>
    %cst_7 = arith.constant 5.000000e-01 : f32
    %12 = vector.broadcast %cst_7 : f32 to vector<16x128xf32>
    %13 = arith.addf %11, %12 : vector<16x128xf32>
    %14 = vector.extract_strided_slice %5 {offsets = [0, 128], sizes = [16, 128], strides = [1, 1]} : vector<16x512xf32> to vector<16x128xf32>
    %cst_8 = arith.constant 5.000000e-01 : f32
    %15 = vector.broadcast %cst_8 : f32 to vector<16x128xf32>
    %16 = arith.mulf %15, %14 : vector<16x128xf32>
    %17 = math.tanh %16 : vector<16x128xf32>
    %cst_9 = arith.constant 5.000000e-01 : f32
    %18 = vector.broadcast %cst_9 : f32 to vector<16x128xf32>
    %19 = arith.mulf %18, %17 : vector<16x128xf32>
    %cst_10 = arith.constant 5.000000e-01 : f32
    %20 = vector.broadcast %cst_10 : f32 to vector<16x128xf32>
    %21 = arith.addf %19, %20 : vector<16x128xf32>
    %22 = vector.extract_strided_slice %5 {offsets = [0, 256], sizes = [16, 128], strides = [1, 1]} : vector<16x512xf32> to vector<16x128xf32>
    %23 = math.tanh %22 : vector<16x128xf32>
    %24 = vector.extract_strided_slice %5 {offsets = [0, 384], sizes = [16, 128], strides = [1, 1]} : vector<16x512xf32> to vector<16x128xf32>
    %cst_11 = arith.constant 5.000000e-01 : f32
    %25 = vector.broadcast %cst_11 : f32 to vector<16x128xf32>
    %26 = arith.mulf %25, %24 : vector<16x128xf32>
    %27 = math.tanh %26 : vector<16x128xf32>
    %cst_12 = arith.constant 5.000000e-01 : f32
    %28 = vector.broadcast %cst_12 : f32 to vector<16x128xf32>
    %29 = arith.mulf %28, %27 : vector<16x128xf32>
    %cst_13 = arith.constant 5.000000e-01 : f32
    %30 = vector.broadcast %cst_13 : f32 to vector<16x128xf32>
    %31 = arith.addf %29, %30 : vector<16x128xf32>
    %c0_14 = arith.constant 0 : index
    %c0_15 = arith.constant 0 : index
    %32 = vector.load %arg2[%c0_14, %c0_15] : memref<16x128xf32, #tpu.memory_space<vmem>>, vector<16x128xf32>
    %33 = arith.mulf %13, %32 : vector<16x128xf32>
    %34 = arith.mulf %21, %23 : vector<16x128xf32>
    %35 = arith.addf %33, %34 : vector<16x128xf32>
    %36 = math.tanh %35 : vector<16x128xf32>
    %37 = arith.mulf %36, %31 : vector<16x128xf32>
    %c0_16 = arith.constant 0 : index
    %c0_17 = arith.constant 0 : index
    %38 = vector.load %arg5[%c0_16, %c0_17] : memref<16x128xf32, #tpu.memory_space<vmem>>, vector<16x128xf32>
    tpu.vector_store %arg5[%c0_16, %c0_17], %37 {strides = array<i32>} : memref<16x128xf32, #tpu.memory_space<vmem>>, vector<16x128xf32>,
    %c0_18 = arith.constant 0 : index
    %c0_19 = arith.constant 0 : index
    %39 = vector.load %arg6[%c0_18, %c0_19] : memref<16x128xf32, #tpu.memory_space<vmem>>, vector<16x128xf32>
    tpu.vector_store %arg6[%c0_18, %c0_19], %35 {strides = array<i32>} : memref<16x128xf32, #tpu.memory_space<vmem>>, vector<16x128xf32>,
    return
  }
  func.func @transform_0(%arg0: i32) -> (i32, i32) {
    %c0_i32 = arith.constant 0 : i32
    %c0_i32_0 = arith.constant 0 : i32
    return %arg0, %c0_i32 : i32, i32
  }
  func.func @transform_1(%arg0: i32) -> (i32, i32) {
    %c0_i32 = arith.constant 0 : i32
    %c0_i32_0 = arith.constant 0 : i32
    return %arg0, %c0_i32 : i32, i32
  }
  func.func @transform_2(%arg0: i32) -> (i32, i32) {
    %c0_i32 = arith.constant 0 : i32
    %c0_i32_0 = arith.constant 0 : i32
    %c0_i32_1 = arith.constant 0 : i32
    return %c0_i32, %c0_i32_0 : i32, i32
  }
  func.func @transform_3(%arg0: i32) -> (i32, i32) {
    %c0_i32 = arith.constant 0 : i32
    %c0_i32_0 = arith.constant 0 : i32
    %c0_i32_1 = arith.constant 0 : i32
    return %c0_i32, %c0_i32_0 : i32, i32
  }
  func.func @transform_4(%arg0: i32) -> (i32, i32) {
    %c0_i32 = arith.constant 0 : i32
    %c0_i32_0 = arith.constant 0 : i32
    return %arg0, %c0_i32 : i32, i32
  }
  func.func @transform_5(%arg0: i32) -> (i32, i32) {
    %c0_i32 = arith.constant 0 : i32
    %c0_i32_0 = arith.constant 0 : i32
    return %arg0, %c0_i32 : i32, i32
  }
}

</mosaic_0001>

<llo_original>
// kernel: tpu_custom_call.1
$region0: #{tpu_custom_call.1}
  #allocation0 [shape = 'u32[]', space=smem, size = 0x4, offset = 0x4, fixed_abs, tag = 'smem constant byte address 0x4 - core index']
  #allocation1 [shape = 'u32[144,128]{1,0:T(1,128)}', space=vmem, size = 0x12000, scoped, tag = 'internal scratch']
  %s0 = inlined_call_operand.hbm [shape: bf16[16,256], index: 0, kind: input, shape index: {}]
  %s1 = inlined_call_operand.hbm [shape: f32[16,128], index: 1, kind: input, shape index: {}]
  %s2 = inlined_call_operand.hbm [shape: bf16[256,512], index: 2, kind: input, shape index: {}]
  %s3 = inlined_call_operand.vmem [shape: f32[1,512], index: 3, kind: input, shape index: {}]
  %s4 = inlined_call_operand.hbm [shape: f32[16,128], index: 4, kind: output, shape index: {0}]
  %s5 = inlined_call_operand.hbm [shape: f32[16,128], index: 5, kind: output, shape index: {1}]
  %6 = xla_tuple %s4, %s5
  %s7 = sld [smem:[#allocation0]]
  $region46: #{tpu_custom_call.1} parent=0
    _
  %s9 = ssub.s32 1, %s7
  %s10 = scalar_select 0, %s9, %s7
  $region1: #{tpu_custom_call.1} parent=0
    #allocation2 [shape = 'u8[8192]{0}', space=vmem, size = 0x2000, scoped, tag = 'input window, operand 0, single buffered']
    #allocation3 [shape = 's32[1]{0}', space=sflag, size = 0x4, scoped, tag = 'scoped memory for tpu_custom_call.1']
    #allocation4 [shape = 's32[1]{0}', space=sflag, size = 0x4, scoped, tag = 'scoped memory for tpu_custom_call.1']
    #allocation5 [shape = 'u8[8192]{0}', space=vmem, size = 0x2000, scoped, tag = 'input window, operand 1, single buffered']
    #allocation6 [shape = 's32[1]{0}', space=sflag, size = 0x4, scoped, tag = 'scoped memory for tpu_custom_call.1']
    #allocation7 [shape = 'u8[262144]{0}', space=vmem, size = 0x40000, scoped, tag = 'input window, operand 2, single buffered']
    #allocation8 [shape = 'u8[8192]{0}', space=vmem, size = 0x2000, scoped, tag = 'output window, operand 0, single buffered']
    #allocation9 [shape = 'u8[8192]{0}', space=vmem, size = 0x2000, scoped, tag = 'output window, operand 1, single buffered']
    #allocation10 [shape = 's32[1]{0}', space=sflag, size = 0x4, scoped, tag = 'scoped memory for tpu_custom_call.1']
    %11 = vsyncpa [#allocation3], 0
    %12 = vsyncpa [#allocation6], 0
    %13 = vsyncpa [#allocation4], 0
    %14 = vsyncpa [#allocation10], 0
    // Predicated region
    $region2: #{tpu_custom_call.1} parent=1 // pred_check
      _
    $region3: #{tpu_custom_call.1} parent=1 // pred_check_branch
      %16 = sbr.rel (0) target = $region5
    $region4: #{tpu_custom_call.1} parent=1 // pred_region
      %s18 = ssub.s32 256, 256
      %19 = vsyncadd [#allocation3], %s18
      %s20 = sshll.u32 [#allocation2], 4
      %s21 = int_to_ptr.vmem [resolvable:$true] %s20
      %26 = dma.hbm_to_vmem [thread:$0]  %s0, 256, %s21, [#allocation3], 128, 128, 8
    $region5: #{tpu_custom_call.1} parent=1 // pred_fallthru
      _
    // Predicated region
    $region6: #{tpu_custom_call.1} parent=1 // pred_check
      _
    $region7: #{tpu_custom_call.1} parent=1 // pred_check_branch
      %28 = sbr.rel (0) target = $region9
    $region8: #{tpu_custom_call.1} parent=1 // pred_region
      %s30 = ssub.s32 256, 256
      %31 = vsyncadd [#allocation6], %s30
      %s32 = sshll.u32 [#allocation5], 4
      %s33 = int_to_ptr.vmem [resolvable:$true] %s32
      %38 = dma.hbm_to_vmem [thread:$0]  %s1, 256, %s33, [#allocation6], 128, 128, 8
    $region9: #{tpu_custom_call.1} parent=1 // pred_fallthru
      _
    // Predicated region
    $region10: #{tpu_custom_call.1} parent=1 // pred_check
      _
    $region11: #{tpu_custom_call.1} parent=1 // pred_check_branch
      %40 = sbr.rel (0) target = $region13
    $region12: #{tpu_custom_call.1} parent=1 // pred_region
      %s42 = ssub.s32 8192, 8192
      %43 = vsyncadd [#allocation6], %s42
      %s44 = sshll.u32 [#allocation7], 4
      %s45 = int_to_ptr.vmem [resolvable:$true] %s44
      %50 = dma.hbm_to_vmem [thread:$0]  %s2, 8192, %s45, [#allocation6], 256, 256, 16
    $region13: #{tpu_custom_call.1} parent=1 // pred_fallthru
      _
    // Predicated region
    $region14: #{tpu_custom_call.1} parent=1 // pred_check
      _
    $region15: #{tpu_custom_call.1} parent=1 // pred_check_branch
      %52 = sbr.rel (0) target = $region17
    $region16: #{tpu_custom_call.1} parent=1 // pred_region
      _
    $region17: #{tpu_custom_call.1} parent=1 // pred_fallthru
      _
    // Predicated region
    $region18: #{tpu_custom_call.1} parent=1 // pred_check
      _
    $region19: #{tpu_custom_call.1} parent=1 // pred_check_branch
      %54 = sbr.rel (0) target = $region21
    $region20: #{tpu_custom_call.1} parent=1 // pred_region
      %55 = dma.done [#allocation3], 256
    $region21: #{tpu_custom_call.1} parent=1 // pred_fallthru
      _
    // Predicated region
    $region22: #{tpu_custom_call.1} parent=1 // pred_check
      _
    $region23: #{tpu_custom_call.1} parent=1 // pred_check_branch
      %57 = sbr.rel (0) target = $region25
    $region24: #{tpu_custom_call.1} parent=1 // pred_region
      %58 = dma.done [#allocation6], 256
    $region25: #{tpu_custom_call.1} parent=1 // pred_fallthru
      _
    // Predicated region
    $region26: #{tpu_custom_call.1} parent=1 // pred_check
      _
    $region27: #{tpu_custom_call.1} parent=1 // pred_check_branch
      %60 = sbr.rel (0) target = $region29
    $region28: #{tpu_custom_call.1} parent=1 // pred_region
      %61 = dma.done [#allocation6], 8192
    $region29: #{tpu_custom_call.1} parent=1 // pred_fallthru
      _
    %v62 = vld [vmem:[#allocation2] sm:$0xff]
    %v63 = vld [vmem:[#allocation2 + $0x8] sm:$0xff]
    %v64 = vld [vmem:[#allocation7] sm:$0xff]
    %v65 = vld [vmem:[#allocation7 + $0x8] sm:$0xff]
    %v66 = vld [vmem:[#allocation7 + $0x10] sm:$0xff]
    %v67 = vld [vmem:[#allocation7 + $0x18] sm:$0xff]
    %v68 = vld [vmem:[#allocation7 + $0x20] sm:$0xff]
    %v69 = vld [vmem:[#allocation7 + $0x28] sm:$0xff]
    %v70 = vld [vmem:[#allocation7 + $0x30] sm:$0xff]
    %v71 = vld [vmem:[#allocation7 + $0x38] sm:$0xff]
    %v72 = vld [vmem:[#allocation7 + $0x40] sm:$0xff]
    %v73 = vld [vmem:[#allocation7 + $0x48] sm:$0xff]
    %v74 = vld [vmem:[#allocation7 + $0x50] sm:$0xff]
    %v75 = vld [vmem:[#allocation7 + $0x58] sm:$0xff]
    %v76 = vld [vmem:[#allocation7 + $0x60] sm:$0xff]
    %v77 = vld [vmem:[#allocation7 + $0x68] sm:$0xff]
    %v78 = vld [vmem:[#allocation7 + $0x70] sm:$0xff]
    %v79 = vld [vmem:[#allocation7 + $0x78] sm:$0xff]
    %v80 = vld [vmem:[#allocation7 + $0x80] sm:$0xff]
    %v81 = vld [vmem:[#allocation7 + $0x88] sm:$0xff]
    %v82 = vld [vmem:[#allocation7 + $0x90] sm:$0xff]
    %v83 = vld [vmem:[#allocation7 + $0x98] sm:$0xff]
    %v84 = vld [vmem:[#allocation7 + $0xa0] sm:$0xff]
    %v85 = vld [vmem:[#allocation7 + $0xa8] sm:$0xff]
    %v86 = vld [vmem:[#allocation7 + $0xb0] sm:$0xff]
    %v87 = vld [vmem:[#allocation7 + $0xb8] sm:$0xff]
    %v88 = vld [vmem:[#allocation7 + $0xc0] sm:$0xff]
    %v89 = vld [vmem:[#allocation7 + $0xc8] sm:$0xff]
    %v90 = vld [vmem:[#allocation7 + $0xd0] sm:$0xff]
    %v91 = vld [vmem:[#allocation7 + $0xd8] sm:$0xff]
    %v92 = vld [vmem:[#allocation7 + $0xe0] sm:$0xff]
    %v93 = vld [vmem:[#allocation7 + $0xe8] sm:$0xff]
    %v94 = vld [vmem:[#allocation7 + $0xf0] sm:$0xff]
    %v95 = vld [vmem:[#allocation7 + $0xf8] sm:$0xff]
    %v96 = vld [vmem:[#allocation7 + $0x100] sm:$0xff]
    %v97 = vld [vmem:[#allocation7 + $0x108] sm:$0xff]
    %v98 = vld [vmem:[#allocation7 + $0x110] sm:$0xff]
    %v99 = vld [vmem:[#allocation7 + $0x118] sm:$0xff]
    %v100 = vld [vmem:[#allocation7 + $0x120] sm:$0xff]
    %v101 = vld [vmem:[#allocation7 + $0x128] sm:$0xff]
    %v102 = vld [vmem:[#allocation7 + $0x130] sm:$0xff]
    %v103 = vld [vmem:[#allocation7 + $0x138] sm:$0xff]
    %v104 = vld [vmem:[#allocation7 + $0x140] sm:$0xff]
    %v105 = vld [vmem:[#allocation7 + $0x148] sm:$0xff]
    %v106 = vld [vmem:[#allocation7 + $0x150] sm:$0xff]
    %v107 = vld [vmem:[#allocation7 + $0x158] sm:$0xff]
    %v108 = vld [vmem:[#allocation7 + $0x160] sm:$0xff]
    %v109 = vld [vmem:[#allocation7 + $0x168] sm:$0xff]
    %v110 = vld [vmem:[#allocation7 + $0x170] sm:$0xff]
    %v111 = vld [vmem:[#allocation7 + $0x178] sm:$0xff]
    %v112 = vld [vmem:[#allocation7 + $0x180] sm:$0xff]
    %v113 = vld [vmem:[#allocation7 + $0x188] sm:$0xff]
    %v114 = vld [vmem:[#allocation7 + $0x190] sm:$0xff]
    %v115 = vld [vmem:[#allocation7 + $0x198] sm:$0xff]
    %v116 = vld [vmem:[#allocation7 + $0x1a0] sm:$0xff]
    %v117 = vld [vmem:[#allocation7 + $0x1a8] sm:$0xff]
    %v118 = vld [vmem:[#allocation7 + $0x1b0] sm:$0xff]
    %v119 = vld [vmem:[#allocation7 + $0x1b8] sm:$0xff]
    %v120 = vld [vmem:[#allocation7 + $0x1c0] sm:$0xff]
    %v121 = vld [vmem:[#allocation7 + $0x1c8] sm:$0xff]
    %v122 = vld [vmem:[#allocation7 + $0x1d0] sm:$0xff]
    %v123 = vld [vmem:[#allocation7 + $0x1d8] sm:$0xff]
    %v124 = vld [vmem:[#allocation7 + $0x1e0] sm:$0xff]
    %v125 = vld [vmem:[#allocation7 + $0x1e8] sm:$0xff]
    %v126 = vld [vmem:[#allocation7 + $0x1f0] sm:$0xff]
    %v127 = vld [vmem:[#allocation7 + $0x1f8] sm:$0xff]
    %v128 = vld [vmem:[%s3] sm:$0xf]
    %v130 = vlaneseq
    %v131 = vshrl.u32 %v130, 7
    %v132 = vsub.s32 0, %v131
    %v133 = vrot.slane %v128, %v132
    %v134 = vlaneseq
    %v135 = vshrl.u32 %v134, 7
    %v136 = vsub.s32 1, %v135
    %v137 = vrot.slane %v128, %v136
    %v138 = vlaneseq
    %v139 = vshrl.u32 %v138, 7
    %v140 = vsub.s32 2, %v139
    %v141 = vrot.slane %v128, %v140
    %v142 = vlaneseq
    %v143 = vshrl.u32 %v142, 7
    %v144 = vsub.s32 3, %v143
    %v145 = vrot.slane %v128, %v144
    %v152 = vunpack.c.l.b16 %v62
    %v153 = vunpack.c.h.b16 %v62
    %v154 = vunpack.c.l.b16 %v63
    %v155 = vunpack.c.h.b16 %v63
    %v156 = vpack.c.b16 %v154, %v152
    %v157 = vpack.c.b16 %v155, %v153
    %v224 = vunpack.c.l.b16 %v64
    %v225 = vunpack.c.h.b16 %v64
    %v226 = vunpack.c.l.b16 %v65
    %v227 = vunpack.c.h.b16 %v65
    %v228 = vunpack.c.l.b16 %v66
    %v229 = vunpack.c.h.b16 %v66
    %v230 = vunpack.c.l.b16 %v67
    %v231 = vunpack.c.h.b16 %v67
    %v232 = vunpack.c.l.b16 %v68
    %v233 = vunpack.c.h.b16 %v68
    %v234 = vunpack.c.l.b16 %v69
    %v235 = vunpack.c.h.b16 %v69
    %v236 = vunpack.c.l.b16 %v70
    %v237 = vunpack.c.h.b16 %v70
    %v238 = vunpack.c.l.b16 %v71
    %v239 = vunpack.c.h.b16 %v71
    %v240 = vunpack.c.l.b16 %v72
    %v241 = vunpack.c.h.b16 %v72
    %v242 = vunpack.c.l.b16 %v73
    %v243 = vunpack.c.h.b16 %v73
    %v244 = vunpack.c.l.b16 %v74
    %v245 = vunpack.c.h.b16 %v74
    %v246 = vunpack.c.l.b16 %v75
    %v247 = vunpack.c.h.b16 %v75
    %v248 = vunpack.c.l.b16 %v76
    %v249 = vunpack.c.h.b16 %v76
    %v250 = vunpack.c.l.b16 %v77
    %v251 = vunpack.c.h.b16 %v77
    %v252 = vunpack.c.l.b16 %v78
    %v253 = vunpack.c.h.b16 %v78
    %v254 = vunpack.c.l.b16 %v79
    %v255 = vunpack.c.h.b16 %v79
    %v256 = vunpack.c.l.b16 %v80
    %v257 = vunpack.c.h.b16 %v80
    %v258 = vunpack.c.l.b16 %v81
    %v259 = vunpack.c.h.b16 %v81
    %v260 = vunpack.c.l.b16 %v82
    %v261 = vunpack.c.h.b16 %v82
    %v262 = vunpack.c.l.b16 %v83
    %v263 = vunpack.c.h.b16 %v83
    %v264 = vunpack.c.l.b16 %v84
    %v265 = vunpack.c.h.b16 %v84
    %v266 = vunpack.c.l.b16 %v85
    %v267 = vunpack.c.h.b16 %v85
    %v268 = vunpack.c.l.b16 %v86
    %v269 = vunpack.c.h.b16 %v86
    %v270 = vunpack.c.l.b16 %v87
    %v271 = vunpack.c.h.b16 %v87
    %v272 = vunpack.c.l.b16 %v88
    %v273 = vunpack.c.h.b16 %v88
    %v274 = vunpack.c.l.b16 %v89
    %v275 = vunpack.c.h.b16 %v89
    %v276 = vunpack.c.l.b16 %v90
    %v277 = vunpack.c.h.b16 %v90
    %v278 = vunpack.c.l.b16 %v91
    %v279 = vunpack.c.h.b16 %v91
    %v280 = vunpack.c.l.b16 %v92
    %v281 = vunpack.c.h.b16 %v92
    %v282 = vunpack.c.l.b16 %v93
    %v283 = vunpack.c.h.b16 %v93
    %v284 = vunpack.c.l.b16 %v94
    %v285 = vunpack.c.h.b16 %v94
    %v286 = vunpack.c.l.b16 %v95
    %v287 = vunpack.c.h.b16 %v95
    %v288 = vunpack.c.l.b16 %v96
    %v289 = vunpack.c.h.b16 %v96
    %v290 = vunpack.c.l.b16 %v97
    %v291 = vunpack.c.h.b16 %v97
    %v292 = vunpack.c.l.b16 %v98
    %v293 = vunpack.c.h.b16 %v98
    %v294 = vunpack.c.l.b16 %v99
    %v295 = vunpack.c.h.b16 %v99
    %v296 = vunpack.c.l.b16 %v100
    %v297 = vunpack.c.h.b16 %v100
    %v298 = vunpack.c.l.b16 %v101
    %v299 = vunpack.c.h.b16 %v101
    %v300 = vunpack.c.l.b16 %v102
    %v301 = vunpack.c.h.b16 %v102
    %v302 = vunpack.c.l.b16 %v103
    %v303 = vunpack.c.h.b16 %v103
    %v304 = vunpack.c.l.b16 %v104
    %v305 = vunpack.c.h.b16 %v104
    %v306 = vunpack.c.l.b16 %v105
    %v307 = vunpack.c.h.b16 %v105
    %v308 = vunpack.c.l.b16 %v106
    %v309 = vunpack.c.h.b16 %v106
    %v310 = vunpack.c.l.b16 %v107
    %v311 = vunpack.c.h.b16 %v107
    %v312 = vunpack.c.l.b16 %v108
    %v313 = vunpack.c.h.b16 %v108
    %v314 = vunpack.c.l.b16 %v109
    %v315 = vunpack.c.h.b16 %v109
    %v316 = vunpack.c.l.b16 %v110
    %v317 = vunpack.c.h.b16 %v110
    %v318 = vunpack.c.l.b16 %v111
    %v319 = vunpack.c.h.b16 %v111
    %v320 = vunpack.c.l.b16 %v112
    %v321 = vunpack.c.h.b16 %v112
    %v322 = vunpack.c.l.b16 %v113
    %v323 = vunpack.c.h.b16 %v113
    %v324 = vunpack.c.l.b16 %v114
    %v325 = vunpack.c.h.b16 %v114
    %v326 = vunpack.c.l.b16 %v115
    %v327 = vunpack.c.h.b16 %v115
    %v328 = vunpack.c.l.b16 %v116
    %v329 = vunpack.c.h.b16 %v116
    %v330 = vunpack.c.l.b16 %v117
    %v331 = vunpack.c.h.b16 %v117
    %v332 = vunpack.c.l.b16 %v118
    %v333 = vunpack.c.h.b16 %v118
    %v334 = vunpack.c.l.b16 %v119
    %v335 = vunpack.c.h.b16 %v119
    %v336 = vunpack.c.l.b16 %v120
    %v337 = vunpack.c.h.b16 %v120
    %v338 = vunpack.c.l.b16 %v121
    %v339 = vunpack.c.h.b16 %v121
    %v340 = vunpack.c.l.b16 %v122
    %v341 = vunpack.c.h.b16 %v122
    %v342 = vunpack.c.l.b16 %v123
    %v343 = vunpack.c.h.b16 %v123
    %v344 = vunpack.c.l.b16 %v124
    %v345 = vunpack.c.h.b16 %v124
    %v346 = vunpack.c.l.b16 %v125
    %v347 = vunpack.c.h.b16 %v125
    %v348 = vunpack.c.l.b16 %v126
    %v349 = vunpack.c.h.b16 %v126
    %v350 = vunpack.c.l.b16 %v127
    %v351 = vunpack.c.h.b16 %v127
    %v352 = vpack.c.b16 %v228, %v224
    %v353 = vpack.c.b16 %v229, %v225
    %v354 = vpack.c.b16 %v230, %v226
    %v355 = vpack.c.b16 %v231, %v227
    %v356 = vpack.c.b16 %v236, %v232
    %v357 = vpack.c.b16 %v237, %v233
    %v358 = vpack.c.b16 %v238, %v234
    %v359 = vpack.c.b16 %v239, %v235
    %v360 = vpack.c.b16 %v244, %v240
    %v361 = vpack.c.b16 %v245, %v241
    %v362 = vpack.c.b16 %v246, %v242
    %v363 = vpack.c.b16 %v247, %v243
    %v364 = vpack.c.b16 %v252, %v248
    %v365 = vpack.c.b16 %v253, %v249
    %v366 = vpack.c.b16 %v254, %v250
    %v367 = vpack.c.b16 %v255, %v251
    %v368 = vpack.c.b16 %v260, %v256
    %v369 = vpack.c.b16 %v261, %v257
    %v370 = vpack.c.b16 %v262, %v258
    %v371 = vpack.c.b16 %v263, %v259
    %v372 = vpack.c.b16 %v268, %v264
    %v373 = vpack.c.b16 %v269, %v265
    %v374 = vpack.c.b16 %v270, %v266
    %v375 = vpack.c.b16 %v271, %v267
    %v376 = vpack.c.b16 %v276, %v272
    %v377 = vpack.c.b16 %v277, %v273
    %v378 = vpack.c.b16 %v278, %v274
    %v379 = vpack.c.b16 %v279, %v275
    %v380 = vpack.c.b16 %v284, %v280
    %v381 = vpack.c.b16 %v285, %v281
    %v382 = vpack.c.b16 %v286, %v282
    %v383 = vpack.c.b16 %v287, %v283
    %v384 = vpack.c.b16 %v292, %v288
    %v385 = vpack.c.b16 %v293, %v289
    %v386 = vpack.c.b16 %v294, %v290
    %v387 = vpack.c.b16 %v295, %v291
    %v388 = vpack.c.b16 %v300, %v296
    %v389 = vpack.c.b16 %v301, %v297
    %v390 = vpack.c.b16 %v302, %v298
    %v391 = vpack.c.b16 %v303, %v299
    %v392 = vpack.c.b16 %v308, %v304
    %v393 = vpack.c.b16 %v309, %v305
    %v394 = vpack.c.b16 %v310, %v306
    %v395 = vpack.c.b16 %v311, %v307
    %v396 = vpack.c.b16 %v316, %v312
    %v397 = vpack.c.b16 %v317, %v313
    %v398 = vpack.c.b16 %v318, %v314
    %v399 = vpack.c.b16 %v319, %v315
    %v400 = vpack.c.b16 %v324, %v320
    %v401 = vpack.c.b16 %v325, %v321
    %v402 = vpack.c.b16 %v326, %v322
    %v403 = vpack.c.b16 %v327, %v323
    %v404 = vpack.c.b16 %v332, %v328
    %v405 = vpack.c.b16 %v333, %v329
    %v406 = vpack.c.b16 %v334, %v330
    %v407 = vpack.c.b16 %v335, %v331
    %v408 = vpack.c.b16 %v340, %v336
    %v409 = vpack.c.b16 %v341, %v337
    %v410 = vpack.c.b16 %v342, %v338
    %v411 = vpack.c.b16 %v343, %v339
    %v412 = vpack.c.b16 %v348, %v344
    %v413 = vpack.c.b16 %v349, %v345
    %v414 = vpack.c.b16 %v350, %v346
    %v415 = vpack.c.b16 %v351, %v347
    %480 = vmatprep.subr.bf16.mxu0 %v381
    %481 = vmatpush1.bf16.msra.mxu0 %v380
    %482 = vmatprep.subr.bf16.mxu0 %v377
    %483 = vmatpush1.bf16.msra.mxu0 %v376
    %484 = vmatprep.subr.bf16.mxu0 %v373
    %485 = vmatpush1.bf16.msra.mxu0 %v372
    %486 = vmatprep.subr.bf16.mxu0 %v369
    %487 = vmatpush1.bf16.msra.mxu0 %v368
    %488 = vmatprep.subr.bf16.mxu0 %v365
    %489 = vmatpush1.bf16.msra.mxu0 %v364
    %490 = vmatprep.subr.bf16.mxu0 %v361
    %491 = vmatpush1.bf16.msra.mxu0 %v360
    %492 = vmatprep.subr.bf16.mxu0 %v357
    %493 = vmatpush1.bf16.msra.mxu0 %v356
    %494 = vmatprep.subr.bf16.mxu0 %v353
    %495 = vmatpush1.bf16.msra.mxu0 %v352
    %496 = vmatprep.subr.bf16.mxu0 %v413
    %497 = vmatpush2.bf16.msra.mxu0 %v412
    %498 = vmatprep.subr.bf16.mxu0 %v409
    %499 = vmatpush2.bf16.msra.mxu0 %v408
    %500 = vmatprep.subr.bf16.mxu0 %v405
    %501 = vmatpush2.bf16.msra.mxu0 %v404
    %502 = vmatprep.subr.bf16.mxu0 %v401
    %503 = vmatpush2.bf16.msra.mxu0 %v400
    %504 = vmatprep.subr.bf16.mxu0 %v397
    %505 = vmatpush2.bf16.msra.mxu0 %v396
    %506 = vmatprep.subr.bf16.mxu0 %v393
    %507 = vmatpush2.bf16.msra.mxu0 %v392
    %508 = vmatprep.subr.bf16.mxu0 %v389
    %509 = vmatpush2.bf16.msra.mxu0 %v388
    %510 = vmatprep.subr.bf16.mxu0 %v385
    %511 = vmatpush2.bf16.msra.mxu0 %v384
    %512 = vmatprep.mubr.bf16.mxu0 %v157
    %513 = vmatmul.mubr.bf16.gmra.mxu0 %v156
    %v514 = vpop.f32.mrf.mxu0
    %v515 = vadd.f32 %v133, %v514
    %v516 = vpop.f32.mrf.mxu0
    %v517 = vadd.f32 %v137, %v516
    %v518 = vpop.f32.mrf.mxu0
    %v519 = vadd.f32 %v133, %v518
    %v520 = vpop.f32.mrf.mxu0
    %v521 = vadd.f32 %v137, %v520
    %522 = vdwg.mxu0
    %523 = vmatprep.subr.bf16.mxu0 %v383
    %524 = vmatpush1.bf16.msra.mxu0 %v382
    %525 = vmatprep.subr.bf16.mxu0 %v379
    %526 = vmatpush1.bf16.msra.mxu0 %v378
    %527 = vmatprep.subr.bf16.mxu0 %v375
    %528 = vmatpush1.bf16.msra.mxu0 %v374
    %529 = vmatprep.subr.bf16.mxu0 %v371
    %530 = vmatpush1.bf16.msra.mxu0 %v370
    %531 = vmatprep.subr.bf16.mxu0 %v367
    %532 = vmatpush1.bf16.msra.mxu0 %v366
    %533 = vmatprep.subr.bf16.mxu0 %v363
    %534 = vmatpush1.bf16.msra.mxu0 %v362
    %535 = vmatprep.subr.bf16.mxu0 %v359
    %536 = vmatpush1.bf16.msra.mxu0 %v358
    %537 = vmatprep.subr.bf16.mxu0 %v355
    %538 = vmatpush1.bf16.msra.mxu0 %v354
    %539 = vmatprep.subr.bf16.mxu0 %v415
    %540 = vmatpush2.bf16.msra.mxu0 %v414
    %541 = vmatprep.subr.bf16.mxu0 %v411
    %542 = vmatpush2.bf16.msra.mxu0 %v410
    %543 = vmatprep.subr.bf16.mxu0 %v407
    %544 = vmatpush2.bf16.msra.mxu0 %v406
    %545 = vmatprep.subr.bf16.mxu0 %v403
    %546 = vmatpush2.bf16.msra.mxu0 %v402
    %547 = vmatprep.subr.bf16.mxu0 %v399
    %548 = vmatpush2.bf16.msra.mxu0 %v398
    %549 = vmatprep.subr.bf16.mxu0 %v395
    %550 = vmatpush2.bf16.msra.mxu0 %v394
    %551 = vmatprep.subr.bf16.mxu0 %v391
    %552 = vmatpush2.bf16.msra.mxu0 %v390
    %553 = vmatprep.subr.bf16.mxu0 %v387
    %554 = vmatpush2.bf16.msra.mxu0 %v386
    %555 = vmatprep.mubr.bf16.mxu0 %v157
    %556 = vmatmul.mubr.bf16.gmra.mxu0 %v156
    %v557 = vpop.f32.mrf.mxu0
    %v558 = vadd.f32 %v141, %v557
    %v559 = vpop.f32.mrf.mxu0
    %v560 = vadd.f32 %v145, %v559
    %v561 = vpop.f32.mrf.mxu0
    %v562 = vadd.f32 %v141, %v561
    %v563 = vpop.f32.mrf.mxu0
    %v564 = vadd.f32 %v145, %v563
    %565 = vdwg.mxu0
    %v566 = vmul.f32 %v515, 0.5
    %v567 = vmul.f32 %v519, 0.5
    %v568 = vtanh.pop %v566
    %v569 = vtanh.pop %v567
    %v570 = vmul.f32 %v568, 0.5
    %v571 = vmul.f32 %v569, 0.5
    %v572 = vadd.f32 %v570, 0.5
    %v573 = vadd.f32 %v571, 0.5
    %v574 = vmul.f32 %v517, 0.5
    %v575 = vmul.f32 %v521, 0.5
    %v576 = vtanh.pop %v574
    %v577 = vtanh.pop %v575
    %v578 = vmul.f32 %v576, 0.5
    %v579 = vmul.f32 %v577, 0.5
    %v580 = vadd.f32 %v578, 0.5
    %v581 = vadd.f32 %v579, 0.5
    %v582 = vtanh.pop %v558
    %v583 = vtanh.pop %v562
    %v584 = vmul.f32 %v560, 0.5
    %v585 = vmul.f32 %v564, 0.5
    %v586 = vtanh.pop %v584
    %v587 = vtanh.pop %v585
    %v588 = vmul.f32 %v586, 0.5
    %v589 = vmul.f32 %v587, 0.5
    %v590 = vadd.f32 %v588, 0.5
    %v591 = vadd.f32 %v589, 0.5
    %v592 = vld [vmem:[#allocation5] sm:$0xff]
    %v593 = vld [vmem:[#allocation5 + $0x8] sm:$0xff]
    %v594 = vmul.f32 %v572, %v592
    %v595 = vmul.f32 %v573, %v593
    %v596 = vmul.f32 %v580, %v582
    %v597 = vmul.f32 %v581, %v583
    %v598 = vadd.f32 %v594, %v596
    %v599 = vadd.f32 %v595, %v597
    %v600 = vtanh.pop %v598
    %v601 = vtanh.pop %v599
    %v602 = vmul.f32 %v600, %v590
    %v603 = vmul.f32 %v601, %v591
    %604 = vst [vmem:[#allocation8] sm:$0xff] %v602
    %605 = vst [vmem:[#allocation8 + $0x8] sm:$0xff] %v603
    %606 = vst [vmem:[#allocation9] sm:$0xff] %v598
    %607 = vst [vmem:[#allocation9 + $0x8] sm:$0xff] %v599
    // Predicated region
    $region30: #{tpu_custom_call.1} parent=1 // pred_check
      _
    $region31: #{tpu_custom_call.1} parent=1 // pred_check_branch
      %609 = sbr.rel (0) target = $region33
    $region32: #{tpu_custom_call.1} parent=1 // pred_region
      %s611 = ssub.s32 256, 256
      %612 = vsyncadd [#allocation4], %s611
      %s613 = sshll.u32 [#allocation8], 4
      %s614 = int_to_ptr.vmem [resolvable:$true] %s613
      %619 = dma.vmem_to_hbm [thread:$0]  %s614, 256, %s4, [#allocation4], 128, 128, 8
    $region33: #{tpu_custom_call.1} parent=1 // pred_fallthru
      _
    // Predicated region
    $region34: #{tpu_custom_call.1} parent=1 // pred_check
      _
    $region35: #{tpu_custom_call.1} parent=1 // pred_check_branch
      %621 = sbr.rel (0) target = $region37
    $region36: #{tpu_custom_call.1} parent=1 // pred_region
      %s623 = ssub.s32 256, 256
      %624 = vsyncadd [#allocation10], %s623
      %s625 = sshll.u32 [#allocation9], 4
      %s626 = int_to_ptr.vmem [resolvable:$true] %s625
      %631 = dma.vmem_to_hbm [thread:$0]  %s626, 256, %s5, [#allocation10], 128, 128, 8
    $region37: #{tpu_custom_call.1} parent=1 // pred_fallthru
      _
    // Predicated region
    $region38: #{tpu_custom_call.1} parent=1 // pred_check
      _
    $region39: #{tpu_custom_call.1} parent=1 // pred_check_branch
      %633 = sbr.rel (0) target = $region41
    $region40: #{tpu_custom_call.1} parent=1 // pred_region
      %634 = dma.done [#allocation4], 256
    $region41: #{tpu_custom_call.1} parent=1 // pred_fallthru
      _
    // Predicated region
    $region42: #{tpu_custom_call.1} parent=1 // pred_check
      _
    $region43: #{tpu_custom_call.1} parent=1 // pred_check_branch
      %636 = sbr.rel (0) target = $region45
    $region44: #{tpu_custom_call.1} parent=1 // pred_region
      %637 = dma.done [#allocation10], 256
    $region45: #{tpu_custom_call.1} parent=1 // pred_fallthru
      _
    %638 = vsyncpa [#allocation3], 1
    %639 = vsyncpa [#allocation6], 1
    %640 = vsyncpa [#allocation4], 1
    %641 = vsyncpa [#allocation10], 1

// kernel: tpu_custom_call.1
$region0: #{tpu_custom_call.1}
  #allocation0 [shape = 'u32[]', space=smem, size = 0x4, offset = 0x4, fixed_abs, tag = 'smem constant byte address 0x4 - core index']
  #allocation1 [shape = 'u32[144,128]{1,0:T(1,128)}', space=vmem, size = 0x12000, scoped, tag = 'internal scratch']
  %s0 = inlined_call_operand.hbm [shape: bf16[16,256], index: 0, kind: input, shape index: {}]
  %s1 = inlined_call_operand.hbm [shape: f32[16,128], index: 1, kind: input, shape index: {}]
  %s2 = inlined_call_operand.hbm [shape: bf16[256,512], index: 2, kind: input, shape index: {}]
  %s3 = inlined_call_operand.vmem [shape: f32[1,512], index: 3, kind: input, shape index: {}]
  %s4 = inlined_call_operand.hbm [shape: f32[16,128], index: 4, kind: output, shape index: {0}]
  %s5 = inlined_call_operand.hbm [shape: f32[16,128], index: 5, kind: output, shape index: {1}]
  %6 = xla_tuple %s4, %s5
  %s7 = sld [smem:[#allocation0]]
  $region46: #{tpu_custom_call.1} parent=0
    _
  %s9 = ssub.s32 1, %s7
  %s10 = scalar_select 0, %s9, %s7
  $region1: #{tpu_custom_call.1} parent=0
    #allocation2 [shape = 'u8[8192]{0}', space=vmem, size = 0x2000, scoped, tag = 'input window, operand 0, single buffered']
    #allocation3 [shape = 's32[1]{0}', space=sflag, size = 0x4, scoped, tag = 'scoped memory for tpu_custom_call.1']
    #allocation4 [shape = 's32[1]{0}', space=sflag, size = 0x4, scoped, tag = 'scoped memory for tpu_custom_call.1']
    #allocation5 [shape = 'u8[8192]{0}', space=vmem, size = 0x2000, scoped, tag = 'input window, operand 1, single buffered']
    #allocation6 [shape = 's32[1]{0}', space=sflag, size = 0x4, scoped, tag = 'scoped memory for tpu_custom_call.1']
    #allocation7 [shape = 'u8[262144]{0}', space=vmem, size = 0x40000, scoped, tag = 'input window, operand 2, single buffered']
    #allocation8 [shape = 'u8[8192]{0}', space=vmem, size = 0x2000, scoped, tag = 'output window, operand 0, single buffered']
    #allocation9 [shape = 'u8[8192]{0}', space=vmem, size = 0x2000, scoped, tag = 'output window, operand 1, single buffered']
    #allocation10 [shape = 's32[1]{0}', space=sflag, size = 0x4, scoped, tag = 'scoped memory for tpu_custom_call.1']
    %11 = vsyncpa [#allocation3], 0
    %12 = vsyncpa [#allocation6], 0
    %13 = vsyncpa [#allocation4], 0
    %14 = vsyncpa [#allocation10], 0
    // Predicated region
    $region2: #{tpu_custom_call.1} parent=1 // pred_check
      _
    $region3: #{tpu_custom_call.1} parent=1 // pred_check_branch
      %16 = sbr.rel (0) target = $region5
    $region4: #{tpu_custom_call.1} parent=1 // pred_region
      %s18 = ssub.s32 256, 256
      %19 = vsyncadd [#allocation3], %s18
      %s20 = sshll.u32 [#allocation2], 4
      %s21 = int_to_ptr.vmem [resolvable:$true] %s20
      %26 = dma.hbm_to_vmem [thread:$0]  %s0, 256, %s21, [#allocation3], 128, 128, 8
    $region5: #{tpu_custom_call.1} parent=1 // pred_fallthru
      _
    // Predicated region
    $region6: #{tpu_custom_call.1} parent=1 // pred_check
      _
    $region7: #{tpu_custom_call.1} parent=1 // pred_check_branch
      %28 = sbr.rel (0) target = $region9
    $region8: #{tpu_custom_call.1} parent=1 // pred_region
      %s30 = ssub.s32 256, 256
      %31 = vsyncadd [#allocation6], %s30
      %s32 = sshll.u32 [#allocation5], 4
      %s33 = int_to_ptr.vmem [resolvable:$true] %s32
      %38 = dma.hbm_to_vmem [thread:$0]  %s1, 256, %s33, [#allocation6], 128, 128, 8
    $region9: #{tpu_custom_call.1} parent=1 // pred_fallthru
      _
    // Predicated region
    $region10: #{tpu_custom_call.1} parent=1 // pred_check
      _
    $region11: #{tpu_custom_call.1} parent=1 // pred_check_branch
      %40 = sbr.rel (0) target = $region13
    $region12: #{tpu_custom_call.1} parent=1 // pred_region
      %s42 = ssub.s32 8192, 8192
      %43 = vsyncadd [#allocation6], %s42
      %s44 = sshll.u32 [#allocation7], 4
      %s45 = int_to_ptr.vmem [resolvable:$true] %s44
      %50 = dma.hbm_to_vmem [thread:$0]  %s2, 8192, %s45, [#allocation6], 256, 256, 16
    $region13: #{tpu_custom_call.1} parent=1 // pred_fallthru
      _
    // Predicated region
    $region14: #{tpu_custom_call.1} parent=1 // pred_check
      _
    $region15: #{tpu_custom_call.1} parent=1 // pred_check_branch
      %52 = sbr.rel (0) target = $region17
    $region16: #{tpu_custom_call.1} parent=1 // pred_region
      _
    $region17: #{tpu_custom_call.1} parent=1 // pred_fallthru
      _
    // Predicated region
    $region18: #{tpu_custom_call.1} parent=1 // pred_check
      _
    $region19: #{tpu_custom_call.1} parent=1 // pred_check_branch
      %54 = sbr.rel (0) target = $region21
    $region20: #{tpu_custom_call.1} parent=1 // pred_region
      %55 = dma.done [#allocation3], 256
    $region21: #{tpu_custom_call.1} parent=1 // pred_fallthru
      _
    // Predicated region
    $region22: #{tpu_custom_call.1} parent=1 // pred_check
      _
    $region23: #{tpu_custom_call.1} parent=1 // pred_check_branch
      %57 = sbr.rel (0) target = $region25
    $region24: #{tpu_custom_call.1} parent=1 // pred_region
      %58 = dma.done [#allocation6], 256
    $region25: #{tpu_custom_call.1} parent=1 // pred_fallthru
      _
    // Predicated region
    $region26: #{tpu_custom_call.1} parent=1 // pred_check
      _
    $region27: #{tpu_custom_call.1} parent=1 // pred_check_branch
      %60 = sbr.rel (0) target = $region29
    $region28: #{tpu_custom_call.1} parent=1 // pred_region
      %61 = dma.done [#allocation6], 8192
    $region29: #{tpu_custom_call.1} parent=1 // pred_fallthru
      _
    %v62 = vld [vmem:[#allocation2] sm:$0xff]
    %v63 = vld [vmem:[#allocation2 + $0x8] sm:$0xff]
    %v64 = vld [vmem:[#allocation7] sm:$0xff]
    %v65 = vld [vmem:[#allocation7 + $0x8] sm:$0xff]
    %v66 = vld [vmem:[#allocation7 + $0x10] sm:$0xff]
    %v67 = vld [vmem:[#allocation7 + $0x18] sm:$0xff]
    %v68 = vld [vmem:[#allocation7 + $0x20] sm:$0xff]
    %v69 = vld [vmem:[#allocation7 + $0x28] sm:$0xff]
    %v70 = vld [vmem:[#allocation7 + $0x30] sm:$0xff]
    %v71 = vld [vmem:[#allocation7 + $0x38] sm:$0xff]
    %v72 = vld [vmem:[#allocation7 + $0x40] sm:$0xff]
    %v73 = vld [vmem:[#allocation7 + $0x48] sm:$0xff]
    %v74 = vld [vmem:[#allocation7 + $0x50] sm:$0xff]
    %v75 = vld [vmem:[#allocation7 + $0x58] sm:$0xff]
    %v76 = vld [vmem:[#allocation7 + $0x60] sm:$0xff]
    %v77 = vld [vmem:[#allocation7 + $0x68] sm:$0xff]
    %v78 = vld [vmem:[#allocation7 + $0x70] sm:$0xff]
    %v79 = vld [vmem:[#allocation7 + $0x78] sm:$0xff]
    %v80 = vld [vmem:[#allocation7 + $0x80] sm:$0xff]
    %v81 = vld [vmem:[#allocation7 + $0x88] sm:$0xff]
    %v82 = vld [vmem:[#allocation7 + $0x90] sm:$0xff]
    %v83 = vld [vmem:[#allocation7 + $0x98] sm:$0xff]
    %v84 = vld [vmem:[#allocation7 + $0xa0] sm:$0xff]
    %v85 = vld [vmem:[#allocation7 + $0xa8] sm:$0xff]
    %v86 = vld [vmem:[#allocation7 + $0xb0] sm:$0xff]
    %v87 = vld [vmem:[#allocation7 + $0xb8] sm:$0xff]
    %v88 = vld [vmem:[#allocation7 + $0xc0] sm:$0xff]
    %v89 = vld [vmem:[#allocation7 + $0xc8] sm:$0xff]
    %v90 = vld [vmem:[#allocation7 + $0xd0] sm:$0xff]
    %v91 = vld [vmem:[#allocation7 + $0xd8] sm:$0xff]
    %v92 = vld [vmem:[#allocation7 + $0xe0] sm:$0xff]
    %v93 = vld [vmem:[#allocation7 + $0xe8] sm:$0xff]
    %v94 = vld [vmem:[#allocation7 + $0xf0] sm:$0xff]
    %v95 = vld [vmem:[#allocation7 + $0xf8] sm:$0xff]
    %v96 = vld [vmem:[#allocation7 + $0x100] sm:$0xff]
    %v97 = vld [vmem:[#allocation7 + $0x108] sm:$0xff]
    %v98 = vld [vmem:[#allocation7 + $0x110] sm:$0xff]
    %v99 = vld [vmem:[#allocation7 + $0x118] sm:$0xff]
    %v100 = vld [vmem:[#allocation7 + $0x120] sm:$0xff]
    %v101 = vld [vmem:[#allocation7 + $0x128] sm:$0xff]
    %v102 = vld [vmem:[#allocation7 + $0x130] sm:$0xff]
    %v103 = vld [vmem:[#allocation7 + $0x138] sm:$0xff]
    %v104 = vld [vmem:[#allocation7 + $0x140] sm:$0xff]
    %v105 = vld [vmem:[#allocation7 + $0x148] sm:$0xff]
    %v106 = vld [vmem:[#allocation7 + $0x150] sm:$0xff]
    %v107 = vld [vmem:[#allocation7 + $0x158] sm:$0xff]
    %v108 = vld [vmem:[#allocation7 + $0x160] sm:$0xff]
    %v109 = vld [vmem:[#allocation7 + $0x168] sm:$0xff]
    %v110 = vld [vmem:[#allocation7 + $0x170] sm:$0xff]
    %v111 = vld [vmem:[#allocation7 + $0x178] sm:$0xff]
    %v112 = vld [vmem:[#allocation7 + $0x180] sm:$0xff]
    %v113 = vld [vmem:[#allocation7 + $0x188] sm:$0xff]
    %v114 = vld [vmem:[#allocation7 + $0x190] sm:$0xff]
    %v115 = vld [vmem:[#allocation7 + $0x198] sm:$0xff]
    %v116 = vld [vmem:[#allocation7 + $0x1a0] sm:$0xff]
    %v117 = vld [vmem:[#allocation7 + $0x1a8] sm:$0xff]
    %v118 = vld [vmem:[#allocation7 + $0x1b0] sm:$0xff]
    %v119 = vld [vmem:[#allocation7 + $0x1b8] sm:$0xff]
    %v120 = vld [vmem:[#allocation7 + $0x1c0] sm:$0xff]
    %v121 = vld [vmem:[#allocation7 + $0x1c8] sm:$0xff]
    %v122 = vld [vmem:[#allocation7 + $0x1d0] sm:$0xff]
    %v123 = vld [vmem:[#allocation7 + $0x1d8] sm:$0xff]
    %v124 = vld [vmem:[#allocation7 + $0x1e0] sm:$0xff]
    %v125 = vld [vmem:[#allocation7 + $0x1e8] sm:$0xff]
    %v126 = vld [vmem:[#allocation7 + $0x1f0] sm:$0xff]
    %v127 = vld [vmem:[#allocation7 + $0x1f8] sm:$0xff]
    %v128 = vld [vmem:[%s3] sm:$0xf]
    %v130 = vlaneseq
    %v131 = vshrl.u32 %v130, 7
    %v132 = vsub.s32 0, %v131
    %v133 = vrot.slane %v128, %v132
    %v134 = vlaneseq
    %v135 = vshrl.u32 %v134, 7
    %v136 = vsub.s32 1, %v135
    %v137 = vrot.slane %v128, %v136
    %v138 = vlaneseq
    %v139 = vshrl.u32 %v138, 7
    %v140 = vsub.s32 2, %v139
    %v141 = vrot.slane %v128, %v140
    %v142 = vlaneseq
    %v143 = vshrl.u32 %v142, 7
    %v144 = vsub.s32 3, %v143
    %v145 = vrot.slane %v128, %v144
    %v152 = vunpack.c.l.b16 %v62
    %v153 = vunpack.c.h.b16 %v62
    %v154 = vunpack.c.l.b16 %v63
    %v155 = vunpack.c.h.b16 %v63
    %v156 = vpack.c.b16 %v154, %v152
    %v157 = vpack.c.b16 %v155, %v153
    %v224 = vunpack.c.l.b16 %v64
    %v225 = vunpack.c.h.b16 %v64
    %v226 = vunpack.c.l.b16 %v65
    %v227 = vunpack.c.h.b16 %v65
    %v228 = vunpack.c.l.b16 %v66
    %v229 = vunpack.c.h.b16 %v66
    %v230 = vunpack.c.l.b16 %v67
    %v231 = vunpack.c.h.b16 %v67
    %v232 = vunpack.c.l.b16 %v68
    %v233 = vunpack.c.h.b16 %v68
    %v234 = vunpack.c.l.b16 %v69
    %v235 = vunpack.c.h.b16 %v69
    %v236 = vunpack.c.l.b16 %v70
    %v237 = vunpack.c.h.b16 %v70
    %v238 = vunpack.c.l.b16 %v71
    %v239 = vunpack.c.h.b16 %v71
    %v240 = vunpack.c.l.b16 %v72
    %v241 = vunpack.c.h.b16 %v72
    %v242 = vunpack.c.l.b16 %v73
    %v243 = vunpack.c.h.b16 %v73
    %v244 = vunpack.c.l.b16 %v74
    %v245 = vunpack.c.h.b16 %v74
    %v246 = vunpack.c.l.b16 %v75
    %v247 = vunpack.c.h.b16 %v75
    %v248 = vunpack.c.l.b16 %v76
    %v249 = vunpack.c.h.b16 %v76
    %v250 = vunpack.c.l.b16 %v77
    %v251 = vunpack.c.h.b16 %v77
    %v252 = vunpack.c.l.b16 %v78
    %v253 = vunpack.c.h.b16 %v78
    %v254 = vunpack.c.l.b16 %v79
    %v255 = vunpack.c.h.b16 %v79
    %v256 = vunpack.c.l.b16 %v80
    %v257 = vunpack.c.h.b16 %v80
    %v258 = vunpack.c.l.b16 %v81
    %v259 = vunpack.c.h.b16 %v81
    %v260 = vunpack.c.l.b16 %v82
    %v261 = vunpack.c.h.b16 %v82
    %v262 = vunpack.c.l.b16 %v83
    %v263 = vunpack.c.h.b16 %v83
    %v264 = vunpack.c.l.b16 %v84
    %v265 = vunpack.c.h.b16 %v84
    %v266 = vunpack.c.l.b16 %v85
    %v267 = vunpack.c.h.b16 %v85
    %v268 = vunpack.c.l.b16 %v86
    %v269 = vunpack.c.h.b16 %v86
    %v270 = vunpack.c.l.b16 %v87
    %v271 = vunpack.c.h.b16 %v87
    %v272 = vunpack.c.l.b16 %v88
    %v273 = vunpack.c.h.b16 %v88
    %v274 = vunpack.c.l.b16 %v89
    %v275 = vunpack.c.h.b16 %v89
    %v276 = vunpack.c.l.b16 %v90
    %v277 = vunpack.c.h.b16 %v90
    %v278 = vunpack.c.l.b16 %v91
    %v279 = vunpack.c.h.b16 %v91
    %v280 = vunpack.c.l.b16 %v92
    %v281 = vunpack.c.h.b16 %v92
    %v282 = vunpack.c.l.b16 %v93
    %v283 = vunpack.c.h.b16 %v93
    %v284 = vunpack.c.l.b16 %v94
    %v285 = vunpack.c.h.b16 %v94
    %v286 = vunpack.c.l.b16 %v95
    %v287 = vunpack.c.h.b16 %v95
    %v288 = vunpack.c.l.b16 %v96
    %v289 = vunpack.c.h.b16 %v96
    %v290 = vunpack.c.l.b16 %v97
    %v291 = vunpack.c.h.b16 %v97
    %v292 = vunpack.c.l.b16 %v98
    %v293 = vunpack.c.h.b16 %v98
    %v294 = vunpack.c.l.b16 %v99
    %v295 = vunpack.c.h.b16 %v99
    %v296 = vunpack.c.l.b16 %v100
    %v297 = vunpack.c.h.b16 %v100
    %v298 = vunpack.c.l.b16 %v101
    %v299 = vunpack.c.h.b16 %v101
    %v300 = vunpack.c.l.b16 %v102
    %v301 = vunpack.c.h.b16 %v102
    %v302 = vunpack.c.l.b16 %v103
    %v303 = vunpack.c.h.b16 %v103
    %v304 = vunpack.c.l.b16 %v104
    %v305 = vunpack.c.h.b16 %v104
    %v306 = vunpack.c.l.b16 %v105
    %v307 = vunpack.c.h.b16 %v105
    %v308 = vunpack.c.l.b16 %v106
    %v309 = vunpack.c.h.b16 %v106
    %v310 = vunpack.c.l.b16 %v107
    %v311 = vunpack.c.h.b16 %v107
    %v312 = vunpack.c.l.b16 %v108
    %v313 = vunpack.c.h.b16 %v108
    %v314 = vunpack.c.l.b16 %v109
    %v315 = vunpack.c.h.b16 %v109
    %v316 = vunpack.c.l.b16 %v110
    %v317 = vunpack.c.h.b16 %v110
    %v318 = vunpack.c.l.b16 %v111
    %v319 = vunpack.c.h.b16 %v111
    %v320 = vunpack.c.l.b16 %v112
    %v321 = vunpack.c.h.b16 %v112
    %v322 = vunpack.c.l.b16 %v113
    %v323 = vunpack.c.h.b16 %v113
    %v324 = vunpack.c.l.b16 %v114
    %v325 = vunpack.c.h.b16 %v114
    %v326 = vunpack.c.l.b16 %v115
    %v327 = vunpack.c.h.b16 %v115
    %v328 = vunpack.c.l.b16 %v116
    %v329 = vunpack.c.h.b16 %v116
    %v330 = vunpack.c.l.b16 %v117
    %v331 = vunpack.c.h.b16 %v117
    %v332 = vunpack.c.l.b16 %v118
    %v333 = vunpack.c.h.b16 %v118
    %v334 = vunpack.c.l.b16 %v119
    %v335 = vunpack.c.h.b16 %v119
    %v336 = vunpack.c.l.b16 %v120
    %v337 = vunpack.c.h.b16 %v120
    %v338 = vunpack.c.l.b16 %v121
    %v339 = vunpack.c.h.b16 %v121
    %v340 = vunpack.c.l.b16 %v122
    %v341 = vunpack.c.h.b16 %v122
    %v342 = vunpack.c.l.b16 %v123
    %v343 = vunpack.c.h.b16 %v123
    %v344 = vunpack.c.l.b16 %v124
    %v345 = vunpack.c.h.b16 %v124
    %v346 = vunpack.c.l.b16 %v125
    %v347 = vunpack.c.h.b16 %v125
    %v348 = vunpack.c.l.b16 %v126
    %v349 = vunpack.c.h.b16 %v126
    %v350 = vunpack.c.l.b16 %v127
    %v351 = vunpack.c.h.b16 %v127
    %v352 = vpack.c.b16 %v228, %v224
    %v353 = vpack.c.b16 %v229, %v225
    %v354 = vpack.c.b16 %v230, %v226
    %v355 = vpack.c.b16 %v231, %v227
    %v356 = vpack.c.b16 %v236, %v232
    %v357 = vpack.c.b16 %v237, %v233
    %v358 = vpack.c.b16 %v238, %v234
    %v359 = vpack.c.b16 %v239, %v235
    %v360 = vpack.c.b16 %v244, %v240
    %v361 = vpack.c.b16 %v245, %v241
    %v362 = vpack.c.b16 %v246, %v242
    %v363 = vpack.c.b16 %v247, %v243
    %v364 = vpack.c.b16 %v252, %v248
    %v365 = vpack.c.b16 %v253, %v249
    %v366 = vpack.c.b16 %v254, %v250
    %v367 = vpack.c.b16 %v255, %v251
    %v368 = vpack.c.b16 %v260, %v256
    %v369 = vpack.c.b16 %v261, %v257
    %v370 = vpack.c.b16 %v262, %v258
    %v371 = vpack.c.b16 %v263, %v259
    %v372 = vpack.c.b16 %v268, %v264
    %v373 = vpack.c.b16 %v269, %v265
    %v374 = vpack.c.b16 %v270, %v266
    %v375 = vpack.c.b16 %v271, %v267
    %v376 = vpack.c.b16 %v276, %v272
    %v377 = vpack.c.b16 %v277, %v273
    %v378 = vpack.c.b16 %v278, %v274
    %v379 = vpack.c.b16 %v279, %v275
    %v380 = vpack.c.b16 %v284, %v280
    %v381 = vpack.c.b16 %v285, %v281
    %v382 = vpack.c.b16 %v286, %v282
    %v383 = vpack.c.b16 %v287, %v283
    %v384 = vpack.c.b16 %v292, %v288
    %v385 = vpack.c.b16 %v293, %v289
    %v386 = vpack.c.b16 %v294, %v290
    %v387 = vpack.c.b16 %v295, %v291
    %v388 = vpack.c.b16 %v300, %v296
    %v389 = vpack.c.b16 %v301, %v297
    %v390 = vpack.c.b16 %v302, %v298
    %v391 = vpack.c.b16 %v303, %v299
    %v392 = vpack.c.b16 %v308, %v304
    %v393 = vpack.c.b16 %v309, %v305
    %v394 = vpack.c.b16 %v310, %v306
    %v395 = vpack.c.b16 %v311, %v307
    %v396 = vpack.c.b16 %v316, %v312
    %v397 = vpack.c.b16 %v317, %v313
    %v398 = vpack.c.b16 %v318, %v314
    %v399 = vpack.c.b16 %v319, %v315
    %v400 = vpack.c.b16 %v324, %v320
    %v401 = vpack.c.b16 %v325, %v321
    %v402 = vpack.c.b16 %v326, %v322
    %v403 = vpack.c.b16 %v327, %v323
    %v404 = vpack.c.b16 %v332, %v328
    %v405 = vpack.c.b16 %v333, %v329
    %v406 = vpack.c.b16 %v334, %v330
    %v407 = vpack.c.b16 %v335, %v331
    %v408 = vpack.c.b16 %v340, %v336
    %v409 = vpack.c.b16 %v341, %v337
    %v410 = vpack.c.b16 %v342, %v338
    %v411 = vpack.c.b16 %v343, %v339
    %v412 = vpack.c.b16 %v348, %v344
    %v413 = vpack.c.b16 %v349, %v345
    %v414 = vpack.c.b16 %v350, %v346
    %v415 = vpack.c.b16 %v351, %v347
    %480 = vmatprep.subr.bf16.mxu0 %v381
    %481 = vmatpush1.bf16.msra.mxu0 %v380
    %482 = vmatprep.subr.bf16.mxu0 %v377
    %483 = vmatpush1.bf16.msra.mxu0 %v376
    %484 = vmatprep.subr.bf16.mxu0 %v373
    %485 = vmatpush1.bf16.msra.mxu0 %v372
    %486 = vmatprep.subr.bf16.mxu0 %v369
    %487 = vmatpush1.bf16.msra.mxu0 %v368
    %488 = vmatprep.subr.bf16.mxu0 %v365
    %489 = vmatpush1.bf16.msra.mxu0 %v364
    %490 = vmatprep.subr.bf16.mxu0 %v361
    %491 = vmatpush1.bf16.msra.mxu0 %v360
    %492 = vmatprep.subr.bf16.mxu0 %v357
    %493 = vmatpush1.bf16.msra.mxu0 %v356
    %494 = vmatprep.subr.bf16.mxu0 %v353
    %495 = vmatpush1.bf16.msra.mxu0 %v352
    %496 = vmatprep.subr.bf16.mxu0 %v413
    %497 = vmatpush2.bf16.msra.mxu0 %v412
    %498 = vmatprep.subr.bf16.mxu0 %v409
    %499 = vmatpush2.bf16.msra.mxu0 %v408
    %500 = vmatprep.subr.bf16.mxu0 %v405
    %501 = vmatpush2.bf16.msra.mxu0 %v404
    %502 = vmatprep.subr.bf16.mxu0 %v401
    %503 = vmatpush2.bf16.msra.mxu0 %v400
    %504 = vmatprep.subr.bf16.mxu0 %v397
    %505 = vmatpush2.bf16.msra.mxu0 %v396
    %506 = vmatprep.subr.bf16.mxu0 %v393
    %507 = vmatpush2.bf16.msra.mxu0 %v392
    %508 = vmatprep.subr.bf16.mxu0 %v389
    %509 = vmatpush2.bf16.msra.mxu0 %v388
    %510 = vmatprep.subr.bf16.mxu0 %v385
    %511 = vmatpush2.bf16.msra.mxu0 %v384
    %512 = vmatprep.mubr.bf16.mxu0 %v157
    %513 = vmatmul.mubr.bf16.gmra.mxu0 %v156
    %v514 = vpop.f32.mrf.mxu0
    %v515 = vadd.f32 %v133, %v514
    %v516 = vpop.f32.mrf.mxu0
    %v517 = vadd.f32 %v137, %v516
    %v518 = vpop.f32.mrf.mxu0
    %v519 = vadd.f32 %v133, %v518
    %v520 = vpop.f32.mrf.mxu0
    %v521 = vadd.f32 %v137, %v520
    %522 = vdwg.mxu0
    %523 = vmatprep.subr.bf16.mxu0 %v383
    %524 = vmatpush1.bf16.msra.mxu0 %v382
    %525 = vmatprep.subr.bf16.mxu0 %v379
    %526 = vmatpush1.bf16.msra.mxu0 %v378
    %527 = vmatprep.subr.bf16.mxu0 %v375
    %528 = vmatpush1.bf16.msra.mxu0 %v374
    %529 = vmatprep.subr.bf16.mxu0 %v371
    %530 = vmatpush1.bf16.msra.mxu0 %v370
    %531 = vmatprep.subr.bf16.mxu0 %v367
    %532 = vmatpush1.bf16.msra.mxu0 %v366
    %533 = vmatprep.subr.bf16.mxu0 %v363
    %534 = vmatpush1.bf16.msra.mxu0 %v362
    %535 = vmatprep.subr.bf16.mxu0 %v359
    %536 = vmatpush1.bf16.msra.mxu0 %v358
    %537 = vmatprep.subr.bf16.mxu0 %v355
    %538 = vmatpush1.bf16.msra.mxu0 %v354
    %539 = vmatprep.subr.bf16.mxu0 %v415
    %540 = vmatpush2.bf16.msra.mxu0 %v414
    %541 = vmatprep.subr.bf16.mxu0 %v411
    %542 = vmatpush2.bf16.msra.mxu0 %v410
    %543 = vmatprep.subr.bf16.mxu0 %v407
    %544 = vmatpush2.bf16.msra.mxu0 %v406
    %545 = vmatprep.subr.bf16.mxu0 %v403
    %546 = vmatpush2.bf16.msra.mxu0 %v402
    %547 = vmatprep.subr.bf16.mxu0 %v399
    %548 = vmatpush2.bf16.msra.mxu0 %v398
    %549 = vmatprep.subr.bf16.mxu0 %v395
    %550 = vmatpush2.bf16.msra.mxu0 %v394
    %551 = vmatprep.subr.bf16.mxu0 %v391
    %552 = vmatpush2.bf16.msra.mxu0 %v390
    %553 = vmatprep.subr.bf16.mxu0 %v387
    %554 = vmatpush2.bf16.msra.mxu0 %v386
    %555 = vmatprep.mubr.bf16.mxu0 %v157
    %556 = vmatmul.mubr.bf16.gmra.mxu0 %v156
    %v557 = vpop.f32.mrf.mxu0
    %v558 = vadd.f32 %v141, %v557
    %v559 = vpop.f32.mrf.mxu0
    %v560 = vadd.f32 %v145, %v559
    %v561 = vpop.f32.mrf.mxu0
    %v562 = vadd.f32 %v141, %v561
    %v563 = vpop.f32.mrf.mxu0
    %v564 = vadd.f32 %v145, %v563
    %565 = vdwg.mxu0
    %v566 = vmul.f32 %v515, 0.5
    %v567 = vmul.f32 %v519, 0.5
    %v568 = vtanh.pop %v566
    %v569 = vtanh.pop %v567
    %v570 = vmul.f32 %v568, 0.5
    %v571 = vmul.f32 %v569, 0.5
    %v572 = vadd.f32 %v570, 0.5
    %v573 = vadd.f32 %v571, 0.5
    %v574 = vmul.f32 %v517, 0.5
    %v575 = vmul.f32 %v521, 0.5
    %v576 = vtanh.pop %v574
    %v577 = vtanh.pop %v575
    %v578 = vmul.f32 %v576, 0.5
    %v579 = vmul.f32 %v577, 0.5
    %v580 = vadd.f32 %v578, 0.5
    %v581 = vadd.f32 %v579, 0.5
    %v582 = vtanh.pop %v558
    %v583 = vtanh.pop %v562
    %v584 = vmul.f32 %v560, 0.5
    %v585 = vmul.f32 %v564, 0.5
    %v586 = vtanh.pop %v584
    %v587 = vtanh.pop %v585
    %v588 = vmul.f32 %v586, 0.5
    %v589 = vmul.f32 %v587, 0.5
    %v590 = vadd.f32 %v588, 0.5
    %v591 = vadd.f32 %v589, 0.5
    %v592 = vld [vmem:[#allocation5] sm:$0xff]
    %v593 = vld [vmem:[#allocation5 + $0x8] sm:$0xff]
    %v594 = vmul.f32 %v572, %v592
    %v595 = vmul.f32 %v573, %v593
    %v596 = vmul.f32 %v580, %v582
    %v597 = vmul.f32 %v581, %v583
    %v598 = vadd.f32 %v594, %v596
    %v599 = vadd.f32 %v595, %v597
    %v600 = vtanh.pop %v598
    %v601 = vtanh.pop %v599
    %v602 = vmul.f32 %v600, %v590
    %v603 = vmul.f32 %v601, %v591
    %604 = vst [vmem:[#allocation8] sm:$0xff] %v602
    %605 = vst [vmem:[#allocation8 + $0x8] sm:$0xff] %v603
    %606 = vst [vmem:[#allocation9] sm:$0xff] %v598
    %607 = vst [vmem:[#allocation9 + $0x8] sm:$0xff] %v599
    // Predicated region
    $region30: #{tpu_custom_call.1} parent=1 // pred_check
      _
    $region31: #{tpu_custom_call.1} parent=1 // pred_check_branch
      %609 = sbr.rel (0) target = $region33
    $region32: #{tpu_custom_call.1} parent=1 // pred_region
      %s611 = ssub.s32 256, 256
      %612 = vsyncadd [#allocation4], %s611
      %s613 = sshll.u32 [#allocation8], 4
      %s614 = int_to_ptr.vmem [resolvable:$true] %s613
      %619 = dma.vmem_to_hbm [thread:$0]  %s614, 256, %s4, [#allocation4], 128, 128, 8
    $region33: #{tpu_custom_call.1} parent=1 // pred_fallthru
      _
    // Predicated region
    $region34: #{tpu_custom_call.1} parent=1 // pred_check
      _
    $region35: #{tpu_custom_call.1} parent=1 // pred_check_branch
      %621 = sbr.rel (0) target = $region37
    $region36: #{tpu_custom_call.1} parent=1 // pred_region
      %s623 = ssub.s32 256, 256
      %624 = vsyncadd [#allocation10], %s623
      %s625 = sshll.u32 [#allocation9], 4
      %s626 = int_to_ptr.vmem [resolvable:$true] %s625
      %631 = dma.vmem_to_hbm [thread:$0]  %s626, 256, %s5, [#allocation10], 128, 128, 8
    $region37: #{tpu_custom_call.1} parent=1 // pred_fallthru
      _
    // Predicated region
    $region38: #{tpu_custom_call.1} parent=1 // pred_check
      _
    $region39: #{tpu_custom_call.1} parent=1 // pred_check_branch
      %633 = sbr.rel (0) target = $region41
    $region40: #{tpu_custom_call.1} parent=1 // pred_region
      %634 = dma.done [#allocation4], 256
    $region41: #{tpu_custom_call.1} parent=1 // pred_fallthru
      _
    // Predicated region
    $region42: #{tpu_custom_call.1} parent=1 // pred_check
      _
    $region43: #{tpu_custom_call.1} parent=1 // pred_check_branch
      %636 = sbr.rel (0) target = $region45
    $region44: #{tpu_custom_call.1} parent=1 // pred_region
      %637 = dma.done [#allocation10], 256
    $region45: #{tpu_custom_call.1} parent=1 // pred_fallthru
      _
    %638 = vsyncpa [#allocation3], 1
    %639 = vsyncpa [#allocation6], 1
    %640 = vsyncpa [#allocation4], 1
    %641 = vsyncpa [#allocation10], 1

</llo_original>
